<compile_context>
chip_gen: v5e
topology: v5e:2x2
jax: 0.10.0
libtpu: 0.0.40
codegen_flags: <defaults>
</compile_context>

<pallas_src>
import functools

import jax
import jax.numpy as jnp
from jax.experimental import pallas as pl
from jax.experimental.pallas import tpu as pltpu


# ----------------------------------------------------------------------------
# Kernel: full attention for one batch element, heads batched in one dot_general.
# ----------------------------------------------------------------------------
def _attention_kernel(x_ref, wq_ref, wk_ref, wv_ref, wo_ref, bo_ref, o_ref, *,
                      heads, dim_head):
    H, dh = heads, dim_head
    x = x_ref[0]                                   # (n, dim) f32
    n, dim = x.shape

    # Broadcast activations along a new leading head axis (major-dim broadcast only;
    # no lane/sublane relayout).  bf16 for MXU inputs.
    xb = jnp.broadcast_to(x.astype(jnp.bfloat16)[None], (H, n, dim))   # (H, n, dim)

    wq = wq_ref[...]                               # (H, dim, dh) bf16, scale pre-folded
    wk = wk_ref[...]
    wv = wv_ref[...]

    # QKV projection: one head-batched matmul each (f32 accumulation).
    q = jnp.einsum('hnd,hdk->hnk', xb, wq, preferred_element_type=jnp.float32)
    k = jnp.einsum('hnd,hdk->hnk', xb, wk, preferred_element_type=jnp.float32)
    v = jnp.einsum('hnd,hdk->hnk', xb, wv, preferred_element_type=jnp.float32)

    # Scaled dot-product attention (scale already folded into wq); softmax in f32.
    dots = jnp.einsum('hid,hjd->hij', q.astype(jnp.bfloat16), k.astype(jnp.bfloat16),
                      preferred_element_type=jnp.float32)              # (H, n, n)
    dots = dots - jnp.max(dots, axis=-1, keepdims=True)
    p = jnp.exp(dots)
    p = p * pl.reciprocal(jnp.sum(p, axis=-1, keepdims=True), approx=True)

    out = jnp.einsum('hij,hjd->hid', p.astype(jnp.bfloat16), v.astype(jnp.bfloat16),
                     preferred_element_type=jnp.float32)               # (H, n, dh)

    # Output projection: y = sum_h out[h] @ W_out[h] + b_out   (equivalent to
    # 'b h n d -> b n (h d)' merge followed by nn.Linear, without any lane transpose).
    yh = jnp.einsum('hid,hdo->hio', out.astype(jnp.bfloat16), wo_ref[...],
                    preferred_element_type=jnp.float32)                # (H, n, dim)
    y = jnp.sum(yh, axis=0) + bo_ref[0]                                # (n, dim) f32

    # TODO(synk): optional boolean `mask` argument of the PyTorch module is not
    # implemented (mask=None path only).
    o_ref[0] = y


# ----------------------------------------------------------------------------
# Wrapper
# ----------------------------------------------------------------------------
def _full_spec(shape):
    return pl.BlockSpec(shape, lambda i: tuple(0 for _ in shape))


def attention(x, w_qkv, w_out, b_out, *, heads, dim_head):
    """x: (B, N, dim) f32; w_qkv: (dim, 3*inner); w_out: (inner, dim); b_out: (dim,)."""
    b, n, dim = x.shape
    inner = heads * dim_head
    scale = dim_head ** -0.5

    # Wrapper-side (one-time, plain XLA) weight re-layout:
    #  - split fused QKV weight into per-head (H, dim, dim_head) tensors,
    #  - fold the softmax scale into W_q,
    #  - reshape W_out to (H, dim_head, dim),
    #  - cast weights to bf16 (half the weight DMA bytes, full-rate MXU on v6e/v7x).
    wq, wk, wv = jnp.split(w_qkv.astype(jnp.float32), 3, axis=1)       # each (dim, inner)

    def to_heads(w):                                                   # (dim, H*dh) -> (H, dim, dh)
        return w.reshape(dim, heads, dim_head).transpose(1, 0, 2)

    wq_h = (to_heads(wq) * scale).astype(jnp.bfloat16)
    wk_h = to_heads(wk).astype(jnp.bfloat16)
    wv_h = to_heads(wv).astype(jnp.bfloat16)
    wo_h = w_out.astype(jnp.float32).reshape(heads, dim_head, dim).astype(jnp.bfloat16)
    bo = b_out.astype(jnp.float32).reshape(1, dim)

    kernel = functools.partial(_attention_kernel, heads=heads, dim_head=dim_head)
    return pl.pallas_call(
        kernel,
        out_shape=jax.ShapeDtypeStruct((b, n, dim), jnp.float32),
        grid=(b,),
        in_specs=[
            pl.BlockSpec((1, n, dim), lambda i: (i, 0, 0)),            # x
            _full_spec((heads, dim, dim_head)),                        # W_q (scaled)
            _full_spec((heads, dim, dim_head)),                        # W_k
            _full_spec((heads, dim, dim_head)),                        # W_v
            _full_spec((heads, dim_head, dim)),                        # W_out
            _full_spec((1, dim)),                                      # b_out
        ],
        out_specs=pl.BlockSpec((1, n, dim), lambda i: (i, 0, 0)),
        compiler_params=pltpu.CompilerParams(dimension_semantics=("parallel",)),
    )(x.astype(jnp.float32), wq_h, wk_h, wv_h, wo_h, bo)


# ----------------------------------------------------------------------------
# Pure-JAX reference (mirrors the PyTorch forward, mask=None, dropout=0.0)
# ----------------------------------------------------------------------------
def attention_reference(x, w_qkv, w_out, b_out, *, heads, dim_head):
    b, n, dim = x.shape
    inner = heads * dim_head
    qkv = x @ w_qkv                                                    # (b, n, 3*inner)
    q, k, v = jnp.split(qkv, 3, axis=-1)

    def split_heads(t):                                                # 'b n (h d) -> b h n d'
        return t.reshape(b, n, heads, dim_head).transpose(0, 2, 1, 3)

    q, k, v = map(split_heads, (q, k, v))
    dots = jnp.einsum('bhid,bhjd->bhij', q, k) * (dim_head ** -0.5)
    attn = jax.nn.softmax(dots, axis=-1)
    out = jnp.einsum('bhij,bhjd->bhid', attn, v)
    out = out.transpose(0, 2, 1, 3).reshape(b, n, inner)               # 'b h n d -> b n (h d)'
    return out @ w_out + b_out


if __name__ == "__main__":
    # Small config: dim=32, heads=4, dim_head=8, batch=2, seq=8, dropout=0.0
    B, N, DIM = 2, 8, 32
    HEADS, DIM_HEAD = 4, 8
    INNER = HEADS * DIM_HEAD

    key = jax.random.PRNGKey(0)
    kx, k1, k2, k3 = jax.random.split(key, 4)
    x = jax.random.normal(kx, (B, N, DIM), jnp.float32)
    w_qkv = 0.1 * jax.random.normal(k1, (DIM, 3 * INNER), jnp.float32)  # to_qkv (bias=False)
    w_out = 0.1 * jax.random.normal(k2, (INNER, DIM), jnp.float32)      # to_out Linear weight (in,out)
    b_out = 0.1 * jax.random.normal(k3, (DIM,), jnp.float32)            # to_out Linear bias

    out = attention(x, w_qkv, w_out, b_out, heads=HEADS, dim_head=DIM_HEAD)
    out = jax.block_until_ready(out)

    ref = attention_reference(x, w_qkv, w_out, b_out, heads=HEADS, dim_head=DIM_HEAD)
    err = float(jnp.max(jnp.abs(out - ref)))

    assert out.shape == (B, N, DIM)
    assert bool(jnp.all(jnp.isfinite(out)))
    assert err < 5e-2, f"max abs error vs reference too large: {err}"
    print("KERNEL_OK")
</pallas_src>

<mosaic_0001>
module attributes {stable_mosaic.version = 11 : i64} {
  func.func @_attention_kernel(%arg0: i32, %arg1: memref<1x8x32xf32, #tpu.memory_space<vmem>>, %arg2: memref<4x32x8xbf16, #tpu.memory_space<vmem>>, %arg3: memref<4x32x8xbf16, #tpu.memory_space<vmem>>, %arg4: memref<4x32x8xbf16, #tpu.memory_space<vmem>>, %arg5: memref<4x8x32xbf16, #tpu.memory_space<vmem>>, %arg6: memref<1x32xf32, #tpu.memory_space<vmem>>, %arg7: memref<1x8x32xf32, #tpu.memory_space<vmem>>) attributes {dimension_semantics = [#tpu.dimension_semantics<parallel>], iteration_bounds = array<i64: 2>, scalar_prefetch = 0 : i64, scratch_operands = 0 : i64, tpu.core_type = #tpu.core_type<tc>, window_params = [{transform_indices = @transform_0, window_bounds = array<i64: 1, 8, 32>}, {pipeline_mode = #tpu.pipeline_mode<synchronous>, transform_indices = @transform_1, window_bounds = array<i64: 4, 32, 8>}, {pipeline_mode = #tpu.pipeline_mode<synchronous>, transform_indices = @transform_2, window_bounds = array<i64: 4, 32, 8>}, {pipeline_mode = #tpu.pipeline_mode<synchronous>, transform_indices = @transform_3, window_bounds = array<i64: 4, 32, 8>}, {pipeline_mode = #tpu.pipeline_mode<synchronous>, transform_indices = @transform_4, window_bounds = array<i64: 4, 8, 32>}, {pipeline_mode = #tpu.pipeline_mode<synchronous>, transform_indices = @transform_5, window_bounds = array<i64: 1, 32>}, {transform_indices = @transform_6, window_bounds = array<i64: 1, 8, 32>}]} {
    %c0 = arith.constant 0 : index
    %c0_0 = arith.constant 0 : index
    %c0_1 = arith.constant 0 : index
    %0 = vector.load %arg1[%c0, %c0_0, %c0_1] : memref<1x8x32xf32, #tpu.memory_space<vmem>>, vector<1x8x32xf32>
    %1 = vector.shape_cast %0 : vector<1x8x32xf32> to vector<8x32xf32>
    %2 = arith.truncf %1 : vector<8x32xf32> to vector<8x32xbf16>
    %3 = vector.shape_cast %2 : vector<8x32xbf16> to vector<1x8x32xbf16>
    %4 = vector.shape_cast %3 : vector<1x8x32xbf16> to vector<1x8x32xbf16>
    %5 = vector.broadcast %4 : vector<1x8x32xbf16> to vector<4x8x32xbf16>
    %c0_2 = arith.constant 0 : index
    %c0_3 = arith.constant 0 : index
    %c0_4 = arith.constant 0 : index
    %6 = vector.load %arg2[%c0_2, %c0_3, %c0_4] : memref<4x32x8xbf16, #tpu.memory_space<vmem>>, vector<4x32x8xbf16>
    %c0_5 = arith.constant 0 : index
    %c0_6 = arith.constant 0 : index
    %c0_7 = arith.constant 0 : index
    %7 = vector.load %arg3[%c0_5, %c0_6, %c0_7] : memref<4x32x8xbf16, #tpu.memory_space<vmem>>, vector<4x32x8xbf16>
    %c0_8 = arith.constant 0 : index
    %c0_9 = arith.constant 0 : index
    %c0_10 = arith.constant 0 : index
    %8 = vector.load %arg4[%c0_8, %c0_9, %c0_10] : memref<4x32x8xbf16, #tpu.memory_space<vmem>>, vector<4x32x8xbf16>
    "tpu.trace_start"() <{level = 10 : i32, message = "hnd,hdk->hnk"}> : () -> ()
    %cst = arith.constant dense<0.000000e+00> : vector<4x8x8xf32>
    %9 = tpu.matmul %5, %6, %cst {dimension_numbers = #tpu.dot_dimension_numbers<[2], [1], [1], [2], [0, 0, 0, 1, 1, 2], [0], [0]>} : vector<4x8x32xbf16>, vector<4x32x8xbf16>, vector<4x8x8xf32> -> vector<4x8x8xf32>
    %cst_11 = arith.constant dense<0.000000e+00> : vector<4x8x8xf32>
    %10 = tpu.matmul %5, %7, %cst_11 {dimension_numbers = #tpu.dot_dimension_numbers<[2], [1], [1], [2], [0, 0, 0, 1, 1, 2], [0], [0]>} : vector<4x8x32xbf16>, vector<4x32x8xbf16>, vector<4x8x8xf32> -> vector<4x8x8xf32>
    %cst_12 = arith.constant dense<0.000000e+00> : vector<4x8x8xf32>
    %11 = tpu.matmul %5, %8, %cst_12 {dimension_numbers = #tpu.dot_dimension_numbers<[2], [1], [1], [2], [0, 0, 0, 1, 1, 2], [0], [0]>} : vector<4x8x32xbf16>, vector<4x32x8xbf16>, vector<4x8x8xf32> -> vector<4x8x8xf32>
    "tpu.trace_stop"() : () -> ()
    %12 = arith.truncf %9 : vector<4x8x8xf32> to vector<4x8x8xbf16>
    %13 = arith.truncf %10 : vector<4x8x8xf32> to vector<4x8x8xbf16>
    "tpu.trace_start"() <{level = 10 : i32, message = "hid,hjd->hij"}> : () -> ()
    %cst_13 = arith.constant dense<0.000000e+00> : vector<4x8x8xf32>
    %14 = tpu.matmul %12, %13, %cst_13 {dimension_numbers = #tpu.dot_dimension_numbers<[2], [2], [1], [1], [0, 0, 0, 1, 1, 1], [0], [0]>} : vector<4x8x8xbf16>, vector<4x8x8xbf16>, vector<4x8x8xf32> -> vector<4x8x8xf32>
    "tpu.trace_stop"() : () -> ()
    %cst_14 = arith.constant dense<0xFF800000> : vector<4x8xf32>
    %15 = vector.multi_reduction <maximumf>, %14, %cst_14 [2] : vector<4x8x8xf32> to vector<4x8xf32>
    %16 = vector.shape_cast %15 : vector<4x8xf32> to vector<4x8x1xf32>
    %17 = vector.broadcast %16 : vector<4x8x1xf32> to vector<4x8x8xf32>
    %18 = arith.subf %14, %17 : vector<4x8x8xf32>
    %19 = math.exp %18 : vector<4x8x8xf32>
    %cst_15 = arith.constant dense<0.000000e+00> : vector<4x8xf32>
    %20 = vector.multi_reduction <add>, %19, %cst_15 [2] : vector<4x8x8xf32> to vector<4x8xf32>
    %21 = vector.shape_cast %20 : vector<4x8xf32> to vector<4x8x1xf32>
    %22 = tpu.reciprocal %21 {approx = true} : vector<4x8x1xf32> -> vector<4x8x1xf32>
    %23 = vector.broadcast %22 : vector<4x8x1xf32> to vector<4x8x8xf32>
    %24 = arith.mulf %19, %23 : vector<4x8x8xf32>
    %25 = arith.truncf %24 : vector<4x8x8xf32> to vector<4x8x8xbf16>
    %26 = arith.truncf %11 : vector<4x8x8xf32> to vector<4x8x8xbf16>
    "tpu.trace_start"() <{level = 10 : i32, message = "hij,hjd->hid"}> : () -> ()
    %cst_16 = arith.constant dense<0.000000e+00> : vector<4x8x8xf32>
    %27 = tpu.matmul %25, %26, %cst_16 {dimension_numbers = #tpu.dot_dimension_numbers<[2], [1], [1], [2], [0, 0, 0, 1, 1, 2], [0], [0]>} : vector<4x8x8xbf16>, vector<4x8x8xbf16>, vector<4x8x8xf32> -> vector<4x8x8xf32>
    "tpu.trace_stop"() : () -> ()
    %28 = arith.truncf %27 : vector<4x8x8xf32> to vector<4x8x8xbf16>
    %c0_17 = arith.constant 0 : index
    %c0_18 = arith.constant 0 : index
    %c0_19 = arith.constant 0 : index
    %29 = vector.load %arg5[%c0_17, %c0_18, %c0_19] : memref<4x8x32xbf16, #tpu.memory_space<vmem>>, vector<4x8x32xbf16>
    "tpu.trace_start"() <{level = 10 : i32, message = "hid,hdo->hio"}> : () -> ()
    %cst_20 = arith.constant dense<0.000000e+00> : vector<4x8x32xf32>
    %30 = tpu.matmul %28, %29, %cst_20 {dimension_numbers = #tpu.dot_dimension_numbers<[2], [1], [1], [2], [0, 0, 0, 1, 1, 2], [0], [0]>} : vector<4x8x8xbf16>, vector<4x8x32xbf16>, vector<4x8x32xf32> -> vector<4x8x32xf32>
    "tpu.trace_stop"() : () -> ()
    %cst_21 = arith.constant dense<0.000000e+00> : vector<8x32xf32>
    %31 = vector.multi_reduction <add>, %30, %cst_21 [0] : vector<4x8x32xf32> to vector<8x32xf32>
    %c0_22 = arith.constant 0 : index
    %c0_23 = arith.constant 0 : index
    %32 = vector.load %arg6[%c0_22, %c0_23] : memref<1x32xf32, #tpu.memory_space<vmem>>, vector<1x32xf32>
    %33 = vector.shape_cast %32 : vector<1x32xf32> to vector<32xf32>
    %34 = vector.shape_cast %33 : vector<32xf32> to vector<1x32xf32>
    %35 = vector.broadcast %34 : vector<1x32xf32> to vector<8x32xf32>
    %36 = arith.addf %31, %35 : vector<8x32xf32>
    %c0_24 = arith.constant 0 : index
    %c0_25 = arith.constant 0 : index
    %c0_26 = arith.constant 0 : index
    %37 = vector.load %arg7[%c0_24, %c0_25, %c0_26] : memref<1x8x32xf32, #tpu.memory_space<vmem>>, vector<1x8x32xf32>
    %38 = vector.shape_cast %37 : vector<1x8x32xf32> to vector<8x32xf32>
    %39 = vector.shape_cast %36 : vector<8x32xf32> to vector<1x8x32xf32>
    tpu.vector_store %arg7[%c0_24, %c0_25, %c0_26], %39 {strides = array<i32>} : memref<1x8x32xf32, #tpu.memory_space<vmem>>, vector<1x8x32xf32>,
    return
  }
  func.func @transform_0(%arg0: i32) -> (i32, i32, i32) {
    %c0_i32 = arith.constant 0 : i32
    %c0_i32_0 = arith.constant 0 : i32
    %c0_i32_1 = arith.constant 0 : i32
    return %arg0, %c0_i32, %c0_i32_0 : i32, i32, i32
  }
  func.func @transform_1(%arg0: i32) -> (i32, i32, i32) {
    %c0_i32 = arith.constant 0 : i32
    %c0_i32_0 = arith.constant 0 : i32
    %c0_i32_1 = arith.constant 0 : i32
    %c0_i32_2 = arith.constant 0 : i32
    return %c0_i32, %c0_i32_0, %c0_i32_1 : i32, i32, i32
  }
  func.func @transform_2(%arg0: i32) -> (i32, i32, i32) {
    %c0_i32 = arith.constant 0 : i32
    %c0_i32_0 = arith.constant 0 : i32
    %c0_i32_1 = arith.constant 0 : i32
    %c0_i32_2 = arith.constant 0 : i32
    return %c0_i32, %c0_i32_0, %c0_i32_1 : i32, i32, i32
  }
  func.func @transform_3(%arg0: i32) -> (i32, i32, i32) {
    %c0_i32 = arith.constant 0 : i32
    %c0_i32_0 = arith.constant 0 : i32
    %c0_i32_1 = arith.constant 0 : i32
    %c0_i32_2 = arith.constant 0 : i32
    return %c0_i32, %c0_i32_0, %c0_i32_1 : i32, i32, i32
  }
  func.func @transform_4(%arg0: i32) -> (i32, i32, i32) {
    %c0_i32 = arith.constant 0 : i32
    %c0_i32_0 = arith.constant 0 : i32
    %c0_i32_1 = arith.constant 0 : i32
    %c0_i32_2 = arith.constant 0 : i32
    return %c0_i32, %c0_i32_0, %c0_i32_1 : i32, i32, i32
  }
  func.func @transform_5(%arg0: i32) -> (i32, i32) {
    %c0_i32 = arith.constant 0 : i32
    %c0_i32_0 = arith.constant 0 : i32
    %c0_i32_1 = arith.constant 0 : i32
    return %c0_i32, %c0_i32_0 : i32, i32
  }
  func.func @transform_6(%arg0: i32) -> (i32, i32, i32) {
    %c0_i32 = arith.constant 0 : i32
    %c0_i32_0 = arith.constant 0 : i32
    %c0_i32_1 = arith.constant 0 : i32
    return %arg0, %c0_i32, %c0_i32_0 : i32, i32, i32
  }
}

</mosaic_0001>

<llo_original>
// kernel: tpu_custom_call.1
$region0: #{tpu_custom_call.1}
  #allocation0 [shape = 'u32[]', space=smem, size = 0x4, offset = 0x4, fixed_abs, tag = 'smem constant byte address 0x4 - core index']
  #allocation1 [shape = 'u32[72,128]{1,0:T(1,128)}', space=vmem, size = 0x9000, scoped, tag = 'internal scratch']
  %s0 = inlined_call_operand.vmem [shape: f32[2,8,32], index: 0, kind: input, shape index: {}]
  %s1 = inlined_call_operand.vmem [shape: bf16[4,32,8], index: 1, kind: input, shape index: {}]
  %s2 = inlined_call_operand.vmem [shape: bf16[4,32,8], index: 2, kind: input, shape index: {}]
  %s3 = inlined_call_operand.vmem [shape: bf16[4,32,8], index: 3, kind: input, shape index: {}]
  %s4 = inlined_call_operand.vmem [shape: bf16[4,8,32], index: 4, kind: input, shape index: {}]
  %s5 = inlined_call_operand.vmem [shape: f32[1,32], index: 5, kind: input, shape index: {}]
  %s6 = inlined_call_operand.hbm [shape: f32[2,8,32], index: 6, kind: output, shape index: {}]
  %s7 = sld [smem:[#allocation0]]
  $region57: #{tpu_custom_call.1} parent=0
    _
  %s9 = ssub.s32 1, %s7
  %s10 = scalar_select 0, %s9, %s7
  $region1: #{tpu_custom_call.1} parent=0
    #allocation2 [shape = 'u8[8192]{0}', space=vmem, size = 0x2000, scoped, tag = 'output window, operand 0']
    #allocation3 [shape = 's32[2]{0}', space=sflag, size = 0x8, scoped, tag = 'scoped memory for tpu_custom_call.1']
    %11 = vsyncpa [#allocation3], 0
    %s12 = scalar_lea.sflag [#allocation3], 1
    %13 = vsyncpa %s12, 0
    loop: start=0, step=1, limit=4
    $region2: #{tpu_custom_call.1} parent=1 // loop_pre_header
      _
    $region3: #{tpu_custom_call.1} parent=1 // loop_header
      %s15 = sphi 0, %s19
      %p16 = scmp.ge.s32.totalorder %s15, 4
      %s25 = sphi 0, %s27
      %s28 = sphi 0, %s25
      %s29 = sphi 0, %s28
      %s45 = sphi 0, %s29
      %s49 = sphi 0, %s49
      %s51 = sphi 0, %s49
      %s52 = sphi 0, %s51
      %s66 = sphi 0, %s52
      %s70 = sphi 0, %s70
      %s72 = sphi 0, %s70
      %s73 = sphi 0, %s72
      %s87 = sphi 0, %s73
      %s91 = sphi 0, %s91
      %s93 = sphi 0, %s91
      %s94 = sphi 0, %s93
      %s108 = sphi 0, %s94
      %s112 = sphi 0, %s112
      %s114 = sphi 0, %s112
      %s115 = sphi 0, %s114
      %s129 = sphi 0, %s115
      %s133 = sphi 0, %s133
      %s135 = sphi 0, %s133
      %s136 = sphi 0, %s135
      %s150 = sphi 0, %s136
      %s156 = sphi 0, %s158
      %s159 = sphi 0, %s156
      %s160 = sphi 0, %s159
      %s176 = sphi 0, %s160
    $region4: #{tpu_custom_call.1} parent=1 // loop_header_branch
      %18 = sbr.rel (%p16) target = $region8
    $region5: #{tpu_custom_call.1} parent=1 // loop_body
      %s20 = ssub.s32 %s15, 1
      %s21 = ssub.s32 %s15, 2
      %s22 = sadd.s32 %s15, 1
      %s23 = ssub.s32 %s15, %s22
      %p24 = scmp.eq.s32.totalorder %s23, 0
      %s26 = sadd.s32 %s25, 1
      %s27 = scalar_select %p24, %s25, %s26
      %p30 = pneg %p24
      %p31 = scmp.eq.s32.totalorder %s15, 1
      %p32 = por %p30, %p31
      %p33 = scmp.ne.s32.totalorder %s25, %s28
      %p34 = scmp.eq.s32.totalorder %s15, 0
      %p35 = por %p33, %p34
      %p36 = scmp.ne.s32.totalorder %s25, %s28
      %p37 = scmp.eq.s32.totalorder %s20, 1
      %p38 = por %p36, %p37
      %p39 = scmp.ne.s32.totalorder %s28, %s29
      %p40 = scmp.eq.s32.totalorder %s20, 0
      %p41 = por %p39, %p40
      %p42 = scmp.ne.s32.totalorder %s28, %s29
      %p43 = scmp.eq.s32.totalorder %s21, 1
      %p44 = por %p42, %p43
      %p46 = scmp.ne.s32.totalorder %s29, %s45
      %p47 = scmp.eq.s32.totalorder %s21, 0
      %p48 = por %p46, %p47
      %s50 = sadd.s32 %s49, 1
      %p53 = scmp.eq.s32.totalorder %s15, 1
      %p54 = scmp.ne.s32.totalorder %s49, %s51
      %p55 = scmp.eq.s32.totalorder %s15, 0
      %p56 = por %p54, %p55
      %p57 = scmp.ne.s32.totalorder %s49, %s51
      %p58 = scmp.eq.s32.totalorder %s20, 1
      %p59 = por %p57, %p58
      %p60 = scmp.ne.s32.totalorder %s51, %s52
      %p61 = scmp.eq.s32.totalorder %s20, 0
      %p62 = por %p60, %p61
      %p63 = scmp.ne.s32.totalorder %s51, %s52
      %p64 = scmp.eq.s32.totalorder %s21, 1
      %p65 = por %p63, %p64
      %p67 = scmp.ne.s32.totalorder %s52, %s66
      %p68 = scmp.eq.s32.totalorder %s21, 0
      %p69 = por %p67, %p68
      %s71 = sadd.s32 %s70, 1
      %p74 = scmp.eq.s32.totalorder %s15, 1
      %p75 = scmp.ne.s32.totalorder %s70, %s72
      %p76 = scmp.eq.s32.totalorder %s15, 0
      %p77 = por %p75, %p76
      %p78 = scmp.ne.s32.totalorder %s70, %s72
      %p79 = scmp.eq.s32.totalorder %s20, 1
      %p80 = por %p78, %p79
      %p81 = scmp.ne.s32.totalorder %s72, %s73
      %p82 = scmp.eq.s32.totalorder %s20, 0
      %p83 = por %p81, %p82
      %p84 = scmp.ne.s32.totalorder %s72, %s73
      %p85 = scmp.eq.s32.totalorder %s21, 1
      %p86 = por %p84, %p85
      %p88 = scmp.ne.s32.totalorder %s73, %s87
      %p89 = scmp.eq.s32.totalorder %s21, 0
      %p90 = por %p88, %p89
      %s92 = sadd.s32 %s91, 1
      %p95 = scmp.eq.s32.totalorder %s15, 1
      %p96 = scmp.ne.s32.totalorder %s91, %s93
      %p97 = scmp.eq.s32.totalorder %s15, 0
      %p98 = por %p96, %p97
      %p99 = scmp.ne.s32.totalorder %s91, %s93
      %p100 = scmp.eq.s32.totalorder %s20, 1
      %p101 = por %p99, %p100
      %p102 = scmp.ne.s32.totalorder %s93, %s94
      %p103 = scmp.eq.s32.totalorder %s20, 0
      %p104 = por %p102, %p103
      %p105 = scmp.ne.s32.totalorder %s93, %s94
      %p106 = scmp.eq.s32.totalorder %s21, 1
      %p107 = por %p105, %p106
      %p109 = scmp.ne.s32.totalorder %s94, %s108
      %p110 = scmp.eq.s32.totalorder %s21, 0
      %p111 = por %p109, %p110
      %s113 = sadd.s32 %s112, 1
      %p116 = scmp.eq.s32.totalorder %s15, 1
      %p117 = scmp.ne.s32.totalorder %s112, %s114
      %p118 = scmp.eq.s32.totalorder %s15, 0
      %p119 = por %p117, %p118
      %p120 = scmp.ne.s32.totalorder %s112, %s114
      %p121 = scmp.eq.s32.totalorder %s20, 1
      %p122 = por %p120, %p121
      %p123 = scmp.ne.s32.totalorder %s114, %s115
      %p124 = scmp.eq.s32.totalorder %s20, 0
      %p125 = por %p123, %p124
      %p126 = scmp.ne.s32.totalorder %s114, %s115
      %p127 = scmp.eq.s32.totalorder %s21, 1
      %p128 = por %p126, %p127
      %p130 = scmp.ne.s32.totalorder %s115, %s129
      %p131 = scmp.eq.s32.totalorder %s21, 0
      %p132 = por %p130, %p131
      %s134 = sadd.s32 %s133, 1
      %p137 = scmp.eq.s32.totalorder %s15, 1
      %p138 = scmp.ne.s32.totalorder %s133, %s135
      %p139 = scmp.eq.s32.totalorder %s15, 0
      %p140 = por %p138, %p139
      %p141 = scmp.ne.s32.totalorder %s133, %s135
      %p142 = scmp.eq.s32.totalorder %s20, 1
      %p143 = por %p141, %p142
      %p144 = scmp.ne.s32.totalorder %s135, %s136
      %p145 = scmp.eq.s32.totalorder %s20, 0
      %p146 = por %p144, %p145
      %p147 = scmp.ne.s32.totalorder %s135, %s136
      %p148 = scmp.eq.s32.totalorder %s21, 1
      %p149 = por %p147, %p148
      %p151 = scmp.ne.s32.totalorder %s136, %s150
      %p152 = scmp.eq.s32.totalorder %s21, 0
      %p153 = por %p151, %p152
      %s154 = ssub.s32 %s15, %s22
      %p155 = scmp.eq.s32.totalorder %s154, 0
      %s157 = sadd.s32 %s156, 1
      %s158 = scalar_select %p155, %s156, %s157
      %p161 = pneg %p155
      %p162 = scmp.eq.s32.totalorder %s15, 1
      %p163 = por %p161, %p162
      %p164 = scmp.ne.s32.totalorder %s156, %s159
      %p165 = scmp.eq.s32.totalorder %s15, 0
      %p166 = por %p164, %p165
      %p167 = scmp.ne.s32.totalorder %s156, %s159
      %p168 = scmp.eq.s32.totalorder %s20, 1
      %p169 = por %p167, %p168
      %p170 = scmp.ne.s32.totalorder %s159, %s160
      %p171 = scmp.eq.s32.totalorder %s20, 0
      %p172 = por %p170, %p171
      %p173 = scmp.ne.s32.totalorder %s159, %s160
      %p174 = scmp.eq.s32.totalorder %s21, 1
      %p175 = por %p173, %p174
      %p177 = scmp.ne.s32.totalorder %s160, %s176
      %p178 = scmp.eq.s32.totalorder %s21, 0
      %p179 = por %p177, %p178
      %p180 = scmp.le.s32.totalorder 1, %s15
      %p181 = scmp.lt.s32.totalorder %s15, 3
      %p182 = pnand %p180, %p181
      %p183 = pneg %p182
      // Predicated region
      $region9: #{tpu_custom_call.1} parent=5 // pred_check
        _
      $region10: #{tpu_custom_call.1} parent=5 // pred_check_branch
        %185 = sbr.rel (%p182) target = $region12
      $region11: #{tpu_custom_call.1} parent=5 // pred_region
        %s186 = ssub.s32 %s15, 1
        // Predicated region
        $region13: #{tpu_custom_call.1} parent=11 // pred_check
          %p187 = pneg %p62
        $region14: #{tpu_custom_call.1} parent=11 // pred_check_branch
          %189 = sbr.rel (%p187) target = $region16
        $region15: #{tpu_custom_call.1} parent=11 // pred_region
          _
        $region16: #{tpu_custom_call.1} parent=11 // pred_fallthru
          _
        // Predicated region
        $region17: #{tpu_custom_call.1} parent=11 // pred_check
          %p190 = pneg %p83
        $region18: #{tpu_custom_call.1} parent=11 // pred_check_branch
          %192 = sbr.rel (%p190) target = $region20
        $region19: #{tpu_custom_call.1} parent=11 // pred_region
          _
        $region20: #{tpu_custom_call.1} parent=11 // pred_fallthru
          _
        // Predicated region
        $region21: #{tpu_custom_call.1} parent=11 // pred_check
          %p193 = pneg %p104
        $region22: #{tpu_custom_call.1} parent=11 // pred_check_branch
          %195 = sbr.rel (%p193) target = $region24
        $region23: #{tpu_custom_call.1} parent=11 // pred_region
          _
        $region24: #{tpu_custom_call.1} parent=11 // pred_fallthru
          _
        // Predicated region
        $region25: #{tpu_custom_call.1} parent=11 // pred_check
          %p196 = pneg %p125
        $region26: #{tpu_custom_call.1} parent=11 // pred_check_branch
          %198 = sbr.rel (%p196) target = $region28
        $region27: #{tpu_custom_call.1} parent=11 // pred_region
          _
        $region28: #{tpu_custom_call.1} parent=11 // pred_fallthru
          _
        // Predicated region
        $region29: #{tpu_custom_call.1} parent=11 // pred_check
          %p199 = pneg %p146
        $region30: #{tpu_custom_call.1} parent=11 // pred_check_branch
          %201 = sbr.rel (%p199) target = $region32
        $region31: #{tpu_custom_call.1} parent=11 // pred_region
          _
        $region32: #{tpu_custom_call.1} parent=11 // pred_fallthru
          _
      $region12: #{tpu_custom_call.1} parent=5 // pred_fallthru
        _
      %p202 = scmp.lt.s32.totalorder %s15, 2
      // Predicated region
      $region33: #{tpu_custom_call.1} parent=5 // pred_check
        %p203 = pneg %p202
      $region34: #{tpu_custom_call.1} parent=5 // pred_check_branch
        %205 = sbr.rel (%p203) target = $region36
      $region35: #{tpu_custom_call.1} parent=5 // pred_region
        // Predicated region
        $region37: #{tpu_custom_call.1} parent=35 // pred_check
          %p206 = pneg %p35
        $region38: #{tpu_custom_call.1} parent=35 // pred_check_branch
          %208 = sbr.rel (%p206) target = $region40
        $region39: #{tpu_custom_call.1} parent=35 // pred_region
          %p209 = scmp.lt.s32.totalorder %s15, 1
          %s210 = scalar_select %p209, %s15, 1
          %s211 = smul.addr %s210, 8
          %s212 = scalar_lea.vmem %s0, %s211
        $region40: #{tpu_custom_call.1} parent=35 // pred_fallthru
          _
      $region36: #{tpu_custom_call.1} parent=5 // pred_fallthru
        _
      %p213 = scmp.le.s32.totalorder 1, %s15
      %p214 = scmp.lt.s32.totalorder %s15, 3
      %p215 = pnand %p213, %p214
      %p216 = pneg %p215
      // Predicated region
      $region41: #{tpu_custom_call.1} parent=5 // pred_check
        _
      $region42: #{tpu_custom_call.1} parent=5 // pred_check_branch
        %218 = sbr.rel (%p215) target = $region44
      $region43: #{tpu_custom_call.1} parent=5 // pred_region
        %s219 = ssub.s32 %s15, 1
        %p220 = scmp.lt.s32.totalorder %s20, 1
        %s221 = scalar_select %p220, %s20, 1
        %s222 = smul.addr %s221, 8
        %s223 = scalar_lea.vmem %s0, %s222
        %p224 = pneg %p41
        %p225 = pneg %p38
        %p226 = pneg %p62
        %p227 = pneg %p59
        %p228 = pneg %p83
        %p229 = pneg %p80
        %p230 = pneg %p104
        %p231 = pneg %p101
        %p232 = pneg %p125
        %p233 = pneg %p122
        %p234 = pneg %p146
        %p235 = pneg %p143
        %p236 = pneg %p172
        %p237 = pneg %p169
        %s238 = sand.u32 %s159, 1
        %s239 = scalar_lea.sflag [#allocation3], %s238
        %s240 = sand.u32 %s159, 1
        %s241 = smul.addr %s240, 8
        %s242 = scalar_lea.vmem [#allocation2], %s241
        %p243 = scmp.lt.s32.totalorder %s20, 1
        %s244 = scalar_select %p243, %s20, 1
        %s245 = smul.addr %s244, 8
        %s246 = scalar_lea.vmem %s0, %s245
        %v248 = vld [vmem:[%s246] sm:$0xff]
        %v249 = vpack.c.bf16 %v248, %v248
        %v250 = vld [vmem:[%s1] sm:$0xf]
        %v251 = vld [vmem:[%s1 + $0x4] sm:$0xf]
        %v252 = vld [vmem:[%s1 + $0x8] sm:$0xf]
        %v253 = vld [vmem:[%s1 + $0xc] sm:$0xf]
        %v254 = vld [vmem:[%s1 + $0x10] sm:$0xf]
        %v255 = vld [vmem:[%s1 + $0x14] sm:$0xf]
        %v256 = vld [vmem:[%s1 + $0x18] sm:$0xf]
        %v257 = vld [vmem:[%s1 + $0x1c] sm:$0xf]
        %v258 = vld [vmem:[%s1 + $0x20] sm:$0xf]
        %v259 = vld [vmem:[%s1 + $0x24] sm:$0xf]
        %v260 = vld [vmem:[%s1 + $0x28] sm:$0xf]
        %v261 = vld [vmem:[%s1 + $0x2c] sm:$0xf]
        %v262 = vld [vmem:[%s1 + $0x30] sm:$0xf]
        %v263 = vld [vmem:[%s1 + $0x34] sm:$0xf]
        %v264 = vld [vmem:[%s1 + $0x38] sm:$0xf]
        %v265 = vld [vmem:[%s1 + $0x3c] sm:$0xf]
        %v266 = vld [vmem:[%s2] sm:$0xf]
        %v267 = vld [vmem:[%s2 + $0x4] sm:$0xf]
        %v268 = vld [vmem:[%s2 + $0x8] sm:$0xf]
        %v269 = vld [vmem:[%s2 + $0xc] sm:$0xf]
        %v270 = vld [vmem:[%s2 + $0x10] sm:$0xf]
        %v271 = vld [vmem:[%s2 + $0x14] sm:$0xf]
        %v272 = vld [vmem:[%s2 + $0x18] sm:$0xf]
        %v273 = vld [vmem:[%s2 + $0x1c] sm:$0xf]
        %v274 = vld [vmem:[%s2 + $0x20] sm:$0xf]
        %v275 = vld [vmem:[%s2 + $0x24] sm:$0xf]
        %v276 = vld [vmem:[%s2 + $0x28] sm:$0xf]
        %v277 = vld [vmem:[%s2 + $0x2c] sm:$0xf]
        %v278 = vld [vmem:[%s2 + $0x30] sm:$0xf]
        %v279 = vld [vmem:[%s2 + $0x34] sm:$0xf]
        %v280 = vld [vmem:[%s2 + $0x38] sm:$0xf]
        %v281 = vld [vmem:[%s2 + $0x3c] sm:$0xf]
        %v282 = vld [vmem:[%s3] sm:$0xf]
        %v283 = vld [vmem:[%s3 + $0x4] sm:$0xf]
        %v284 = vld [vmem:[%s3 + $0x8] sm:$0xf]
        %v285 = vld [vmem:[%s3 + $0xc] sm:$0xf]
        %v286 = vld [vmem:[%s3 + $0x10] sm:$0xf]
        %v287 = vld [vmem:[%s3 + $0x14] sm:$0xf]
        %v288 = vld [vmem:[%s3 + $0x18] sm:$0xf]
        %v289 = vld [vmem:[%s3 + $0x1c] sm:$0xf]
        %v290 = vld [vmem:[%s3 + $0x20] sm:$0xf]
        %v291 = vld [vmem:[%s3 + $0x24] sm:$0xf]
        %v292 = vld [vmem:[%s3 + $0x28] sm:$0xf]
        %v293 = vld [vmem:[%s3 + $0x2c] sm:$0xf]
        %v294 = vld [vmem:[%s3 + $0x30] sm:$0xf]
        %v295 = vld [vmem:[%s3 + $0x34] sm:$0xf]
        %v296 = vld [vmem:[%s3 + $0x38] sm:$0xf]
        %v297 = vld [vmem:[%s3 + $0x3c] sm:$0xf]
        %v302 = vunpack.c.l.b16 %v250
        %v303 = vunpack.c.l.b16 %v251
        %v304 = vunpack.c.l.b16 %v252
        %v305 = vunpack.c.l.b16 %v253
        %v306 = vpack.c.b16 %v303, %v302
        %v307 = vpack.c.b16 %v305, %v304
        %vm310 = vcmask 261120
        %v312 = vsel %vm310, %v249, 0
        %314 = vmatpush.bf16.msra.mxu0 0
        %315 = vmatpush.bf16.msra.mxu0 0
        %316 = vmatpush.bf16.msra.mxu0 0
        %317 = vmatpush.bf16.msra.mxu0 0
        %318 = vmatpush.bf16.msra.mxu0 0
        %319 = vmatpush.bf16.msra.mxu0 0
        %320 = vmatpush.bf16.msra.mxu0 %v307
        %321 = vmatpush.bf16.msra.mxu0 %v306
        %322 = vmatmul.bf16.gmra.mxu0 %v312
        %v323 = vpop.f32.mrf.mxu0
        %v324 = vadd.f32 0.0, %v323
        %v325 = vpop.f32.mrf.mxu0
        %326 = vdwg.mxu0
        %v331 = vunpack.c.l.b16 %v254
        %v332 = vunpack.c.l.b16 %v255
        %v333 = vunpack.c.l.b16 %v256
        %v334 = vunpack.c.l.b16 %v257
        %v335 = vpack.c.b16 %v332, %v331
        %v336 = vpack.c.b16 %v334, %v333
        %339 = vmatpush.bf16.msra.mxu0 0
        %340 = vmatpush.bf16.msra.mxu0 0
        %341 = vmatpush.bf16.msra.mxu0 0
        %342 = vmatpush.bf16.msra.mxu0 0
        %343 = vmatpush.bf16.msra.mxu0 0
        %344 = vmatpush.bf16.msra.mxu0 0
        %345 = vmatpush.bf16.msra.mxu0 %v336
        %346 = vmatpush.bf16.msra.mxu0 %v335
        %347 = vmatmul.bf16.gmra.mxu0 %v312
        %v348 = vpop.f32.mrf.mxu0
        %v349 = vadd.f32 0.0, %v348
        %v350 = vpop.f32.mrf.mxu0
        %351 = vdwg.mxu0
        %v356 = vunpack.c.l.b16 %v258
        %v357 = vunpack.c.l.b16 %v259
        %v358 = vunpack.c.l.b16 %v260
        %v359 = vunpack.c.l.b16 %v261
        %v360 = vpack.c.b16 %v357, %v356
        %v361 = vpack.c.b16 %v359, %v358
        %364 = vmatpush.bf16.msra.mxu0 0
        %365 = vmatpush.bf16.msra.mxu0 0
        %366 = vmatpush.bf16.msra.mxu0 0
        %367 = vmatpush.bf16.msra.mxu0 0
        %368 = vmatpush.bf16.msra.mxu0 0
        %369 = vmatpush.bf16.msra.mxu0 0
        %370 = vmatpush.bf16.msra.mxu0 %v361
        %371 = vmatpush.bf16.msra.mxu0 %v360
        %372 = vmatmul.bf16.gmra.mxu0 %v312
        %v373 = vpop.f32.mrf.mxu0
        %v374 = vadd.f32 0.0, %v373
        %v375 = vpop.f32.mrf.mxu0
        %376 = vdwg.mxu0
        %v381 = vunpack.c.l.b16 %v262
        %v382 = vunpack.c.l.b16 %v263
        %v383 = vunpack.c.l.b16 %v264
        %v384 = vunpack.c.l.b16 %v265
        %v385 = vpack.c.b16 %v382, %v381
        %v386 = vpack.c.b16 %v384, %v383
        %389 = vmatpush.bf16.msra.mxu0 0
        %390 = vmatpush.bf16.msra.mxu0 0
        %391 = vmatpush.bf16.msra.mxu0 0
        %392 = vmatpush.bf16.msra.mxu0 0
        %393 = vmatpush.bf16.msra.mxu0 0
        %394 = vmatpush.bf16.msra.mxu0 0
        %395 = vmatpush.bf16.msra.mxu0 %v386
        %396 = vmatpush.bf16.msra.mxu0 %v385
        %397 = vmatmul.bf16.gmra.mxu0 %v312
        %v398 = vpop.f32.mrf.mxu0
        %v399 = vadd.f32 0.0, %v398
        %v400 = vpop.f32.mrf.mxu0
        %401 = vdwg.mxu0
        %v406 = vunpack.c.l.b16 %v266
        %v407 = vunpack.c.l.b16 %v267
        %v408 = vunpack.c.l.b16 %v268
        %v409 = vunpack.c.l.b16 %v269
        %v410 = vpack.c.b16 %v407, %v406
        %v411 = vpack.c.b16 %v409, %v408
        %414 = vmatpush.bf16.msra.mxu0 0
        %415 = vmatpush.bf16.msra.mxu0 0
        %416 = vmatpush.bf16.msra.mxu0 0
        %417 = vmatpush.bf16.msra.mxu0 0
        %418 = vmatpush.bf16.msra.mxu0 0
        %419 = vmatpush.bf16.msra.mxu0 0
        %420 = vmatpush.bf16.msra.mxu0 %v411
        %421 = vmatpush.bf16.msra.mxu0 %v410
        %422 = vmatmul.bf16.gmra.mxu0 %v312
        %v423 = vpop.f32.mrf.mxu0
        %v424 = vadd.f32 0.0, %v423
        %v425 = vpop.f32.mrf.mxu0
        %426 = vdwg.mxu0
        %v431 = vunpack.c.l.b16 %v270
        %v432 = vunpack.c.l.b16 %v271
        %v433 = vunpack.c.l.b16 %v272
        %v434 = vunpack.c.l.b16 %v273
        %v435 = vpack.c.b16 %v432, %v431
        %v436 = vpack.c.b16 %v434, %v433
        %439 = vmatpush.bf16.msra.mxu0 0
        %440 = vmatpush.bf16.msra.mxu0 0
        %441 = vmatpush.bf16.msra.mxu0 0
        %442 = vmatpush.bf16.msra.mxu0 0
        %443 = vmatpush.bf16.msra.mxu0 0
        %444 = vmatpush.bf16.msra.mxu0 0
        %445 = vmatpush.bf16.msra.mxu0 %v436
        %446 = vmatpush.bf16.msra.mxu0 %v435
        %447 = vmatmul.bf16.gmra.mxu0 %v312
        %v448 = vpop.f32.mrf.mxu0
        %v449 = vadd.f32 0.0, %v448
        %v450 = vpop.f32.mrf.mxu0
        %451 = vdwg.mxu0
        %v456 = vunpack.c.l.b16 %v274
        %v457 = vunpack.c.l.b16 %v275
        %v458 = vunpack.c.l.b16 %v276
        %v459 = vunpack.c.l.b16 %v277
        %v460 = vpack.c.b16 %v457, %v456
        %v461 = vpack.c.b16 %v459, %v458
        %464 = vmatpush.bf16.msra.mxu0 0
        %465 = vmatpush.bf16.msra.mxu0 0
        %466 = vmatpush.bf16.msra.mxu0 0
        %467 = vmatpush.bf16.msra.mxu0 0
        %468 = vmatpush.bf16.msra.mxu0 0
        %469 = vmatpush.bf16.msra.mxu0 0
        %470 = vmatpush.bf16.msra.mxu0 %v461
        %471 = vmatpush.bf16.msra.mxu0 %v460
        %472 = vmatmul.bf16.gmra.mxu0 %v312
        %v473 = vpop.f32.mrf.mxu0
        %v474 = vadd.f32 0.0, %v473
        %v475 = vpop.f32.mrf.mxu0
        %476 = vdwg.mxu0
        %v481 = vunpack.c.l.b16 %v278
        %v482 = vunpack.c.l.b16 %v279
        %v483 = vunpack.c.l.b16 %v280
        %v484 = vunpack.c.l.b16 %v281
        %v485 = vpack.c.b16 %v482, %v481
        %v486 = vpack.c.b16 %v484, %v483
        %489 = vmatpush.bf16.msra.mxu0 0
        %490 = vmatpush.bf16.msra.mxu0 0
        %491 = vmatpush.bf16.msra.mxu0 0
        %492 = vmatpush.bf16.msra.mxu0 0
        %493 = vmatpush.bf16.msra.mxu0 0
        %494 = vmatpush.bf16.msra.mxu0 0
        %495 = vmatpush.bf16.msra.mxu0 %v486
        %496 = vmatpush.bf16.msra.mxu0 %v485
        %497 = vmatmul.bf16.gmra.mxu0 %v312
        %v498 = vpop.f32.mrf.mxu0
        %v499 = vadd.f32 0.0, %v498
        %v500 = vpop.f32.mrf.mxu0
        %501 = vdwg.mxu0
        %v506 = vunpack.c.l.b16 %v282
        %v507 = vunpack.c.l.b16 %v283
        %v508 = vunpack.c.l.b16 %v284
        %v509 = vunpack.c.l.b16 %v285
        %v510 = vpack.c.b16 %v507, %v506
        %v511 = vpack.c.b16 %v509, %v508
        %514 = vmatpush.bf16.msra.mxu0 0
        %515 = vmatpush.bf16.msra.mxu0 0
        %516 = vmatpush.bf16.msra.mxu0 0
        %517 = vmatpush.bf16.msra.mxu0 0
        %518 = vmatpush.bf16.msra.mxu0 0
        %519 = vmatpush.bf16.msra.mxu0 0
        %520 = vmatpush.bf16.msra.mxu0 %v511
        %521 = vmatpush.bf16.msra.mxu0 %v510
        %522 = vmatmul.bf16.gmra.mxu0 %v312
        %v523 = vpop.f32.mrf.mxu0
        %v524 = vadd.f32 0.0, %v523
        %v525 = vpop.f32.mrf.mxu0
        %526 = vdwg.mxu0
        %v531 = vunpack.c.l.b16 %v286
        %v532 = vunpack.c.l.b16 %v287
        %v533 = vunpack.c.l.b16 %v288
        %v534 = vunpack.c.l.b16 %v289
        %v535 = vpack.c.b16 %v532, %v531
        %v536 = vpack.c.b16 %v534, %v533
        %539 = vmatpush.bf16.msra.mxu0 0
        %540 = vmatpush.bf16.msra.mxu0 0
        %541 = vmatpush.bf16.msra.mxu0 0
        %542 = vmatpush.bf16.msra.mxu0 0
        %543 = vmatpush.bf16.msra.mxu0 0
        %544 = vmatpush.bf16.msra.mxu0 0
        %545 = vmatpush.bf16.msra.mxu0 %v536
        %546 = vmatpush.bf16.msra.mxu0 %v535
        %547 = vmatmul.bf16.gmra.mxu0 %v312
        %v548 = vpop.f32.mrf.mxu0
        %v549 = vadd.f32 0.0, %v548
        %v550 = vpop.f32.mrf.mxu0
        %551 = vdwg.mxu0
        %v556 = vunpack.c.l.b16 %v290
        %v557 = vunpack.c.l.b16 %v291
        %v558 = vunpack.c.l.b16 %v292
        %v559 = vunpack.c.l.b16 %v293
        %v560 = vpack.c.b16 %v557, %v556
        %v561 = vpack.c.b16 %v559, %v558
        %564 = vmatpush.bf16.msra.mxu0 0
        %565 = vmatpush.bf16.msra.mxu0 0
        %566 = vmatpush.bf16.msra.mxu0 0
        %567 = vmatpush.bf16.msra.mxu0 0
        %568 = vmatpush.bf16.msra.mxu0 0
        %569 = vmatpush.bf16.msra.mxu0 0
        %570 = vmatpush.bf16.msra.mxu0 %v561
        %571 = vmatpush.bf16.msra.mxu0 %v560
        %572 = vmatmul.bf16.gmra.mxu0 %v312
        %v573 = vpop.f32.mrf.mxu0
        %v574 = vadd.f32 0.0, %v573
        %v575 = vpop.f32.mrf.mxu0
        %576 = vdwg.mxu0
        %v581 = vunpack.c.l.b16 %v294
        %v582 = vunpack.c.l.b16 %v295
        %v583 = vunpack.c.l.b16 %v296
        %v584 = vunpack.c.l.b16 %v297
        %v585 = vpack.c.b16 %v582, %v581
        %v586 = vpack.c.b16 %v584, %v583
        %589 = vmatpush.bf16.msra.mxu0 0
        %590 = vmatpush.bf16.msra.mxu0 0
        %591 = vmatpush.bf16.msra.mxu0 0
        %592 = vmatpush.bf16.msra.mxu0 0
        %593 = vmatpush.bf16.msra.mxu0 0
        %594 = vmatpush.bf16.msra.mxu0 0
        %595 = vmatpush.bf16.msra.mxu0 %v586
        %596 = vmatpush.bf16.msra.mxu0 %v585
        %597 = vmatmul.bf16.gmra.mxu0 %v312
        %v598 = vpop.f32.mrf.mxu0
        %v599 = vadd.f32 0.0, %v598
        %v600 = vpop.f32.mrf.mxu0
        %601 = vdwg.mxu0
        %v602 = vpack.c.bf16 %v324, %v324
        %v603 = vpack.c.bf16 %v349, %v349
        %v604 = vpack.c.bf16 %v374, %v374
        %v605 = vpack.c.bf16 %v399, %v399
        %v606 = vpack.c.bf16 %v424, %v424
        %v607 = vpack.c.bf16 %v449, %v449
        %v608 = vpack.c.bf16 %v474, %v474
        %v609 = vpack.c.bf16 %v499, %v499
        %vm610 = vcmask 64512
        %v612 = vsel %vm610, %v602, 0
        %v615 = vsel %vm610, %v606, 0
        %617 = vmatpush.bf16.xpose.msra.mxu0 0
        %618 = vmatpush.bf16.xpose.msra.mxu0 0
        %619 = vmatpush.bf16.xpose.msra.mxu0 0
        %620 = vmatpush.bf16.xpose.msra.mxu0 0
        %621 = vmatpush.bf16.xpose.msra.mxu0 0
        %622 = vmatpush.bf16.xpose.msra.mxu0 0
        %623 = vmatpush.bf16.xpose.msra.mxu0 0
        %624 = vmatpush.bf16.xpose.msra.mxu0 %v615
        %625 = vmatmul.bf16.gmra.mxu0 %v612
        %v626 = vpop.f32.mrf.mxu0
        %v627 = vadd.f32 0.0, %v626
        %v628 = vpop.f32.mrf.mxu0
        %629 = vdwg.mxu0
        %v631 = vsel %vm610, %v603, 0
        %v634 = vsel %vm610, %v607, 0
        %636 = vmatpush.bf16.xpose.msra.mxu0 0
        %637 = vmatpush.bf16.xpose.msra.mxu0 0
        %638 = vmatpush.bf16.xpose.msra.mxu0 0
        %639 = vmatpush.bf16.xpose.msra.mxu0 0
        %640 = vmatpush.bf16.xpose.msra.mxu0 0
        %641 = vmatpush.bf16.xpose.msra.mxu0 0
        %642 = vmatpush.bf16.xpose.msra.mxu0 0
        %643 = vmatpush.bf16.xpose.msra.mxu0 %v634
        %644 = vmatmul.bf16.gmra.mxu0 %v631
        %v645 = vpop.f32.mrf.mxu0
        %v646 = vadd.f32 0.0, %v645
        %v647 = vpop.f32.mrf.mxu0
        %648 = vdwg.mxu0
        %v650 = vsel %vm610, %v604, 0
        %v653 = vsel %vm610, %v608, 0
        %655 = vmatpush.bf16.xpose.msra.mxu0 0
        %656 = vmatpush.bf16.xpose.msra.mxu0 0
        %657 = vmatpush.bf16.xpose.msra.mxu0 0
        %658 = vmatpush.bf16.xpose.msra.mxu0 0
        %659 = vmatpush.bf16.xpose.msra.mxu0 0
        %660 = vmatpush.bf16.xpose.msra.mxu0 0
        %661 = vmatpush.bf16.xpose.msra.mxu0 0
        %662 = vmatpush.bf16.xpose.msra.mxu0 %v653
        %663 = vmatmul.bf16.gmra.mxu0 %v650
        %v664 = vpop.f32.mrf.mxu0
        %v665 = vadd.f32 0.0, %v664
        %v666 = vpop.f32.mrf.mxu0
        %667 = vdwg.mxu0
        %v669 = vsel %vm610, %v605, 0
        %v672 = vsel %vm610, %v609, 0
        %674 = vmatpush.bf16.xpose.msra.mxu0 0
        %675 = vmatpush.bf16.xpose.msra.mxu0 0
        %676 = vmatpush.bf16.xpose.msra.mxu0 0
        %677 = vmatpush.bf16.xpose.msra.mxu0 0
        %678 = vmatpush.bf16.xpose.msra.mxu0 0
        %679 = vmatpush.bf16.xpose.msra.mxu0 0
        %680 = vmatpush.bf16.xpose.msra.mxu0 0
        %681 = vmatpush.bf16.xpose.msra.mxu0 %v672
        %682 = vmatmul.bf16.gmra.mxu0 %v669
        %v683 = vpop.f32.mrf.mxu0
        %v684 = vadd.f32 0.0, %v683
        %v685 = vpop.f32.mrf.mxu0
        %686 = vdwg.mxu0
        %v687 = vsel %vm610, %v627, -inf
        %688 = vmax.xlane.f32.xlu0 %v687
        %v689 = vpop.xlane.xlu0 %688
        %v690 = vsel %vm610, %v646, -inf
        %691 = vmax.xlane.f32.xlu0 %v690
        %v692 = vpop.xlane.xlu0 %691
        %v693 = vsel %vm610, %v665, -inf
        %694 = vmax.xlane.f32.xlu0 %v693
        %v695 = vpop.xlane.xlu0 %694
        %v696 = vsel %vm610, %v684, -inf
        %697 = vmax.xlane.f32.xlu0 %v696
        %v698 = vpop.xlane.xlu0 %697
        %v699 = vsub.f32 %v627, %v689
        %v700 = vsub.f32 %v646, %v692
        %v701 = vsub.f32 %v665, %v695
        %v702 = vsub.f32 %v684, %v698
        %v703 = vmul.f32 %v699, 1.442695
        %v704 = vpow.pop %v703
        %v705 = vmul.f32 %v700, 1.442695
        %v706 = vpow.pop %v705
        %v707 = vmul.f32 %v701, 1.442695
        %v708 = vpow.pop %v707
        %v709 = vmul.f32 %v702, 1.442695
        %v710 = vpow.pop %v709
        %v711 = vsel %vm610, %v704, 0.0
        %712 = vadd.xlane.f32.xlu0 %v711
        %v713 = vpop.xlane.xlu0 %712
        %v714 = vsel %vm610, %v706, 0.0
        %715 = vadd.xlane.f32.xlu0 %v714
        %v716 = vpop.xlane.xlu0 %715
        %v717 = vsel %vm610, %v708, 0.0
        %718 = vadd.xlane.f32.xlu0 %v717
        %v719 = vpop.xlane.xlu0 %718
        %v720 = vsel %vm610, %v710, 0.0
        %721 = vadd.xlane.f32.xlu0 %v720
        %v722 = vpop.xlane.xlu0 %721
        %v723 = vrcp.pop %v713
        %v724 = vrcp.pop %v716
        %v725 = vrcp.pop %v719
        %v726 = vrcp.pop %v722
        %v727 = vmul.f32 %v704, %v723
        %v728 = vmul.f32 %v706, %v724
        %v729 = vmul.f32 %v708, %v725
        %v730 = vmul.f32 %v710, %v726
        %v731 = vpack.c.bf16 %v727, %v727
        %v732 = vpack.c.bf16 %v728, %v728
        %v733 = vpack.c.bf16 %v729, %v729
        %v734 = vpack.c.bf16 %v730, %v730
        %v735 = vpack.c.bf16 %v524, %v524
        %v736 = vpack.c.bf16 %v549, %v549
        %v737 = vpack.c.bf16 %v574, %v574
        %v738 = vpack.c.bf16 %v599, %v599
        %v740 = vsel %vm610, %v731, 0
        %vm742 = vcmask 1043456
        %v744 = vsel %vm742, %v735, 0
        %746 = vmatpush.bf16.msra.mxu0 0
        %747 = vmatpush.bf16.msra.mxu0 0
        %748 = vmatpush.bf16.msra.mxu0 0
        %749 = vmatpush.bf16.msra.mxu0 0
        %750 = vmatpush.bf16.msra.mxu0 0
        %751 = vmatpush.bf16.msra.mxu0 0
        %752 = vmatpush.bf16.msra.mxu0 0
        %753 = vmatpush.bf16.msra.mxu0 %v744
        %754 = vmatmul.bf16.gmra.mxu0 %v740
        %v755 = vpop.f32.mrf.mxu0
        %v756 = vadd.f32 0.0, %v755
        %v757 = vpop.f32.mrf.mxu0
        %758 = vdwg.mxu0
        %v760 = vsel %vm610, %v732, 0
        %v763 = vsel %vm742, %v736, 0
        %765 = vmatpush.bf16.msra.mxu0 0
        %766 = vmatpush.bf16.msra.mxu0 0
        %767 = vmatpush.bf16.msra.mxu0 0
        %768 = vmatpush.bf16.msra.mxu0 0
        %769 = vmatpush.bf16.msra.mxu0 0
        %770 = vmatpush.bf16.msra.mxu0 0
        %771 = vmatpush.bf16.msra.mxu0 0
        %772 = vmatpush.bf16.msra.mxu0 %v763
        %773 = vmatmul.bf16.gmra.mxu0 %v760
        %v774 = vpop.f32.mrf.mxu0
        %v775 = vadd.f32 0.0, %v774
        %v776 = vpop.f32.mrf.mxu0
        %777 = vdwg.mxu0
        %v779 = vsel %vm610, %v733, 0
        %v782 = vsel %vm742, %v737, 0
        %784 = vmatpush.bf16.msra.mxu0 0
        %785 = vmatpush.bf16.msra.mxu0 0
        %786 = vmatpush.bf16.msra.mxu0 0
        %787 = vmatpush.bf16.msra.mxu0 0
        %788 = vmatpush.bf16.msra.mxu0 0
        %789 = vmatpush.bf16.msra.mxu0 0
        %790 = vmatpush.bf16.msra.mxu0 0
        %791 = vmatpush.bf16.msra.mxu0 %v782
        %792 = vmatmul.bf16.gmra.mxu0 %v779
        %v793 = vpop.f32.mrf.mxu0
        %v794 = vadd.f32 0.0, %v793
        %v795 = vpop.f32.mrf.mxu0
        %796 = vdwg.mxu0
        %v798 = vsel %vm610, %v734, 0
        %v801 = vsel %vm742, %v738, 0
        %803 = vmatpush.bf16.msra.mxu0 0
        %804 = vmatpush.bf16.msra.mxu0 0
        %805 = vmatpush.bf16.msra.mxu0 0
        %806 = vmatpush.bf16.msra.mxu0 0
        %807 = vmatpush.bf16.msra.mxu0 0
        %808 = vmatpush.bf16.msra.mxu0 0
        %809 = vmatpush.bf16.msra.mxu0 0
        %810 = vmatpush.bf16.msra.mxu0 %v801
        %811 = vmatmul.bf16.gmra.mxu0 %v798
        %v812 = vpop.f32.mrf.mxu0
        %v813 = vadd.f32 0.0, %v812
        %v814 = vpop.f32.mrf.mxu0
        %815 = vdwg.mxu0
        %v816 = vpack.c.bf16 %v756, %v756
        %v817 = vpack.c.bf16 %v775, %v775
        %v818 = vpack.c.bf16 %v794, %v794
        %v819 = vpack.c.bf16 %v813, %v813
        %v820 = vld [vmem:[%s4] sm:$0xf]
        %v821 = vld [vmem:[%s4 + $0x4] sm:$0xf]
        %v822 = vld [vmem:[%s4 + $0x8] sm:$0xf]
        %v823 = vld [vmem:[%s4 + $0xc] sm:$0xf]
        %v825 = vsel %vm610, %v816, 0
        %v828 = vsel %vm742, %v820, 0
        %830 = vmatpush.bf16.msra.mxu0 0
        %831 = vmatpush.bf16.msra.mxu0 0
        %832 = vmatpush.bf16.msra.mxu0 0
        %833 = vmatpush.bf16.msra.mxu0 0
        %834 = vmatpush.bf16.msra.mxu0 0
        %835 = vmatpush.bf16.msra.mxu0 0
        %836 = vmatpush.bf16.msra.mxu0 0
        %837 = vmatpush.bf16.msra.mxu0 %v828
        %838 = vmatmul.bf16.gmra.mxu0 %v825
        %v839 = vpop.f32.mrf.mxu0
        %v840 = vadd.f32 0.0, %v839
        %v841 = vpop.f32.mrf.mxu0
        %842 = vdwg.mxu0
        %v844 = vsel %vm610, %v817, 0
        %v847 = vsel %vm742, %v821, 0
        %849 = vmatpush.bf16.msra.mxu0 0
        %850 = vmatpush.bf16.msra.mxu0 0
        %851 = vmatpush.bf16.msra.mxu0 0
        %852 = vmatpush.bf16.msra.mxu0 0
        %853 = vmatpush.bf16.msra.mxu0 0
        %854 = vmatpush.bf16.msra.mxu0 0
        %855 = vmatpush.bf16.msra.mxu0 0
        %856 = vmatpush.bf16.msra.mxu0 %v847
        %857 = vmatmul.bf16.gmra.mxu0 %v844
        %v858 = vpop.f32.mrf.mxu0
        %v859 = vadd.f32 0.0, %v858
        %v860 = vpop.f32.mrf.mxu0
        %861 = vdwg.mxu0
        %v863 = vsel %vm610, %v818, 0
        %v866 = vsel %vm742, %v822, 0
        %868 = vmatpush.bf16.msra.mxu0 0
        %869 = vmatpush.bf16.msra.mxu0 0
        %870 = vmatpush.bf16.msra.mxu0 0
        %871 = vmatpush.bf16.msra.mxu0 0
        %872 = vmatpush.bf16.msra.mxu0 0
        %873 = vmatpush.bf16.msra.mxu0 0
        %874 = vmatpush.bf16.msra.mxu0 0
        %875 = vmatpush.bf16.msra.mxu0 %v866
        %876 = vmatmul.bf16.gmra.mxu0 %v863
        %v877 = vpop.f32.mrf.mxu0
        %v878 = vadd.f32 0.0, %v877
        %v879 = vpop.f32.mrf.mxu0
        %880 = vdwg.mxu0
        %v882 = vsel %vm610, %v819, 0
        %v885 = vsel %vm742, %v823, 0
        %887 = vmatpush.bf16.msra.mxu0 0
        %888 = vmatpush.bf16.msra.mxu0 0
        %889 = vmatpush.bf16.msra.mxu0 0
        %890 = vmatpush.bf16.msra.mxu0 0
        %891 = vmatpush.bf16.msra.mxu0 0
        %892 = vmatpush.bf16.msra.mxu0 0
        %893 = vmatpush.bf16.msra.mxu0 0
        %894 = vmatpush.bf16.msra.mxu0 %v885
        %895 = vmatmul.bf16.gmra.mxu0 %v882
        %v896 = vpop.f32.mrf.mxu0
        %v897 = vadd.f32 0.0, %v896
        %v898 = vpop.f32.mrf.mxu0
        %899 = vdwg.mxu0
        %v900 = vsel %vm310, %v840, 0.0
        %v901 = vsel %vm310, %v859, 0.0
        %v902 = vadd.f32 %v900, %v901
        %v903 = vsel %vm310, %v878, 0.0
        %v904 = vadd.f32 %v902, %v903
        %v905 = vsel %vm310, %v897, 0.0
        %v906 = vadd.f32 %v904, %v905
        %v907 = vld [vmem:[%s5] sm:$0x1]
        %v909 = vperm.slane %v907, 0
        %v911 = vadd.f32 %v906, %v909
        %912 = vst.msk [vmem:[%s242] sm:$0xff] %vm310, %v911
        %s913 = sand.u32 %s159, 1
        %s914 = scalar_lea.sflag [#allocation3], %s913
        %s915 = sand.u32 %s159, 1
        %s916 = smul.addr %s915, 8
        %s917 = scalar_lea.vmem [#allocation2], %s916
        // Predicated region
        $region45: #{tpu_custom_call.1} parent=43 // pred_check
          %p918 = pneg %p169
        $region46: #{tpu_custom_call.1} parent=43 // pred_check_branch
          %920 = sbr.rel (%p918) target = $region48
        $region47: #{tpu_custom_call.1} parent=43 // pred_region
          %922 = vsyncadd %s914, 0
          %s923 = smul.addr %s20, 8
          %s924 = scalar_lea.hbm %s6, %s923
          %s926 = sshll.u32 %s917, 4
          %s927 = int_to_ptr.vmem [resolvable:$true] %s926
          %s928 = sshll.u32 %s924, 4
          %s929 = int_to_ptr.hbm [resolvable:$true] %s928
          %931 = dma.vmem_to_hbm [thread:$0]  %s927, 128, %s929, %s914
        $region48: #{tpu_custom_call.1} parent=43 // pred_fallthru
          _
      $region44: #{tpu_custom_call.1} parent=5 // pred_fallthru
        _
      %p932 = scmp.le.s32.totalorder 2, %s15
      // Predicated region
      $region49: #{tpu_custom_call.1} parent=5 // pred_check
        %p933 = pneg %p932
      $region50: #{tpu_custom_call.1} parent=5 // pred_check_branch
        %935 = sbr.rel (%p933) target = $region52
      $region51: #{tpu_custom_call.1} parent=5 // pred_region
        %s936 = ssub.s32 %s15, 2
        // Predicated region
        $region53: #{tpu_custom_call.1} parent=51 // pred_check
          %p937 = pneg %p175
        $region54: #{tpu_custom_call.1} parent=51 // pred_check_branch
          %939 = sbr.rel (%p937) target = $region56
        $region55: #{tpu_custom_call.1} parent=51 // pred_region
          %s940 = sand.u32 %s160, 1
          %s941 = scalar_lea.sflag [#allocation3], %s940
          %s942 = sand.u32 %s160, 1
          %s943 = smul.addr %s942, 8
          %s944 = scalar_lea.vmem [#allocation2], %s943
          %946 = dma.done %s941, 128
        $region56: #{tpu_custom_call.1} parent=51 // pred_fallthru
          _
      $region52: #{tpu_custom_call.1} parent=5 // pred_fallthru
        _
    $region6: #{tpu_custom_call.1} parent=1 // loop_footer
      %s19 = sadd.s32 1, %s15
    $region7: #{tpu_custom_call.1} parent=1 // loop_footer_branch
      %14 = sbr.rel target = $region3
    $region8: #{tpu_custom_call.1} parent=1 // loop_exit
      _
    %947 = vsyncpa [#allocation3], 1
    %s948 = scalar_lea.sflag [#allocation3], 1
    %949 = vsyncpa %s948, 1

</llo_original>
